<compile_context>
chip_gen: v7x
topology: tpu7x:2x2x1
jax: 0.10.0
libtpu: 0.0.40
codegen_flags: <defaults>
</compile_context>

<pallas_src>
import functools

import jax
import jax.numpy as jnp
from jax.experimental import pallas as pl
from jax.experimental.pallas import tpu as pltpu

LANES = 128
SUB = 32          # partial-accumulator rows (4 independent vreg add chains)


def _chip_params():
    """(max_block_rows, parallel_cores) tuned per TPU generation."""
    try:
        kind = jax.devices()[0].device_kind.lower()
    except Exception:
        kind = ""
    if "v7" in kind:
        # 3.2 TB/s HBM: bigger blocks amortize per-step overhead; 2 TCs/chip.
        return 8192, 2
    if any(tag in kind for tag in ("v4", "v5p")):
        return 4096, 2          # megacore chips
    # v5e / v6e: single TensorCore; 1 MiB blocks already amortize step cost.
    return 2048, 1


def _dice_kernel(blocks_per_core, full_blocks, total_blocks, rows_in_last,
                 pred_ref, target_ref, inter_ref, denom_ref):
    c = pl.program_id(0)          # core split axis ("parallel")
    i = pl.program_id(1)          # sequential reduction axis ("arbitrary")

    @pl.when(i == 0)
    def _init():
        inter_ref[...] = jnp.zeros_like(inter_ref)
        denom_ref[...] = jnp.zeros_like(denom_ref)

    block_rows, lanes = pred_ref.shape
    sub, _ = inter_ref.shape
    lb = c * blocks_per_core + i  # logical block id (may overshoot on split axis)

    x = pred_ref[...].astype(jnp.float32)
    t = target_ref[...].astype(jnp.float32)
    # sigmoid: exp + approx reciprocal both go to the EUP slot (off the VALU).
    p = pl.reciprocal(1.0 + jnp.exp(-x), approx=True)

    def _accumulate(pv, tv):
        # (block_rows,128) -> (block_rows/sub, sub, 128): free reshape, then
        # VPU-only vreg adds. Cross-lane reduction is deferred to the wrapper.
        inter_ref[...] += (pv * tv).reshape(-1, sub, lanes).sum(axis=0)
        denom_ref[...] += (pv + tv).reshape(-1, sub, lanes).sum(axis=0)

    # Full blocks: no masking work at all.
    @pl.when(lb < full_blocks)
    def _full():
        _accumulate(p, t)

    # Final partial block: emitted only when the row count is ragged; a cheap
    # row-level mask zeroes the stale VMEM rows past the end of the array.
    if rows_in_last != block_rows:
        @pl.when(lb == total_blocks - 1)
        def _tail():
            row_ids = jax.lax.broadcasted_iota(jnp.int32, (block_rows, lanes), 0)
            keep = row_ids < rows_in_last
            _accumulate(jnp.where(keep, p, 0.0), jnp.where(keep, t, 0.0))


def dice_loss(pred, target, smooth=1.0):
    """Pallas TPU implementation of DiceLoss.forward(pred, target)."""
    n = int(pred.size)
    assert int(target.size) == n and n > 0

    pred_flat = pred.reshape(-1)
    target_flat = target.reshape(-1)
    # Narrow DMA for boolean masks (1 B/elem); cast to f32 happens in-kernel.
    if target_flat.dtype == jnp.bool_:
        target_flat = target_flat.astype(jnp.int8)

    rows = n // LANES
    rem = n - rows * LANES

    inter = jnp.float32(0.0)
    denom = jnp.float32(0.0)

    if rows > 0:
        pred_main = pred_flat[: rows * LANES].reshape(rows, LANES)
        tgt_main = target_flat[: rows * LANES].reshape(rows, LANES)

        max_block_rows, ncores_hw = _chip_params()
        if rows < SUB:
            block_rows = rows          # single block equal to the full array
            sub = rows
        else:
            block_rows = min(max_block_rows, rows)
            block_rows -= block_rows % SUB    # multiple of 32 (int8/bf16 safe)
            sub = SUB

        total_blocks = pl.cdiv(rows, block_rows)
        rows_in_last = rows - (total_blocks - 1) * block_rows
        full_blocks = total_blocks if rows_in_last == block_rows else total_blocks - 1
        ncores = ncores_hw if total_blocks >= 2 else 1
        blocks_per_core = pl.cdiv(total_blocks, ncores)

        def in_map(c, i):
            # Clamp overshoot steps onto the last real block; their
            # accumulation is skipped in-kernel via pl.when.
            return (jnp.minimum(c * blocks_per_core + i, total_blocks - 1), 0)

        in_spec = pl.BlockSpec((block_rows, LANES), in_map)
        out_spec = pl.BlockSpec((sub, LANES), lambda c, i: (c, 0))
        out_shape = jax.ShapeDtypeStruct((ncores * sub, LANES), jnp.float32)

        # Explicit VMEM budget: double-buffered inputs + headroom.
        pipeline_bytes = 2 * block_rows * LANES * (
            pred_main.dtype.itemsize + tgt_main.dtype.itemsize)
        vmem_limit = int(max(pipeline_bytes + (8 << 20), 16 << 20))

        inter_vec, denom_vec = pl.pallas_call(
            functools.partial(_dice_kernel, blocks_per_core, full_blocks,
                              total_blocks, rows_in_last),
            out_shape=(out_shape, out_shape),
            grid_spec=pltpu.PrefetchScalarGridSpec(
                num_scalar_prefetch=0,
                grid=(ncores, blocks_per_core),
                in_specs=[in_spec, in_spec],
                out_specs=(out_spec, out_spec),
            ),
            compiler_params=pltpu.CompilerParams(
                dimension_semantics=("parallel", "arbitrary"),
                vmem_limit_bytes=vmem_limit),
        )(pred_main, tgt_main)

        inter = jnp.sum(inter_vec)
        denom = jnp.sum(denom_vec)          # == sum(p) + sum(t) over main part

    if rem:
        # <128-element tail: negligible, done in plain XLA (no HBM pad copy).
        p_tail = jax.nn.sigmoid(pred_flat[rows * LANES:].astype(jnp.float32))
        t_tail = target_flat[rows * LANES:].astype(jnp.float32)
        inter = inter + jnp.sum(p_tail * t_tail)
        denom = denom + jnp.sum(p_tail) + jnp.sum(t_tail)

    dice = (2.0 * inter + jnp.float32(smooth)) / (denom + jnp.float32(smooth))
    return 1.0 - dice


def dice_loss_ref(pred, target, smooth=1.0):
    p = jax.nn.sigmoid(pred.astype(jnp.float32)).reshape(-1)
    t = target.astype(jnp.float32).reshape(-1)
    inter = jnp.sum(p * t)
    dice = (2.0 * inter + smooth) / (jnp.sum(p) + jnp.sum(t) + smooth)
    return 1.0 - dice


if __name__ == "__main__":
    key = jax.random.PRNGKey(0)
    k1, k2, k3, k4, k5, k6 = jax.random.split(key, 6)

    # NCHW, matching a typical UNet segmentation output.
    B, C, H, W = 2, 4, 16, 16
    pred = jax.random.normal(k1, (B, C, H, W), dtype=jnp.float32)
    target = (jax.random.uniform(k2, (B, C, H, W)) > 0.5).astype(jnp.float32)
    loss = dice_loss(pred, target, smooth=1.0)
    jax.block_until_ready(loss)
    ref = dice_loss_ref(pred, target, smooth=1.0)
    assert jnp.allclose(loss, ref, atol=2e-3, rtol=2e-3), (loss, ref)

    # Ragged element count (600 = 4*128 + 88): exercises the XLA tail path.
    pred_u = jax.random.normal(k3, (2, 3, 10, 10), dtype=jnp.float32)
    target_u = (jax.random.uniform(k4, (2, 3, 10, 10)) > 0.5).astype(jnp.float32)
    loss_u = dice_loss(pred_u, target_u, smooth=1.0)
    jax.block_until_ready(loss_u)
    ref_u = dice_loss_ref(pred_u, target_u, smooth=1.0)
    assert jnp.allclose(loss_u, ref_u, atol=2e-3, rtol=2e-3), (loss_u, ref_u)

    # bf16 logits + bool mask, row count (40) not a multiple of block rows
    # (32): exercises the narrow-dtype DMA and the partial-block mask branch.
    pred_b = jax.random.normal(k5, (1, 1, 40, 128), dtype=jnp.bfloat16)
    target_b = jax.random.uniform(k6, (1, 1, 40, 128)) > 0.5
    loss_b = dice_loss(pred_b, target_b, smooth=1.0)
    jax.block_until_ready(loss_b)
    ref_b = dice_loss_ref(pred_b, target_b, smooth=1.0)
    assert jnp.allclose(loss_b, ref_b, atol=2e-3, rtol=2e-3), (loss_b, ref_b)

    print("KERNEL_OK")
</pallas_src>

<mosaic_0001>
module attributes {stable_mosaic.version = 11 : i64} {
  func.func @_dice_kernel(%arg0: i32, %arg1: i32, %arg2: memref<16x128xf32, #tpu.memory_space<vmem>>, %arg3: memref<16x128xf32, #tpu.memory_space<vmem>>, %arg4: memref<16x128xf32, #tpu.memory_space<vmem>>, %arg5: memref<16x128xf32, #tpu.memory_space<vmem>>) attributes {dimension_semantics = [#tpu.dimension_semantics<parallel>, #tpu.dimension_semantics<arbitrary>], iteration_bounds = array<i64: 1, 1>, scalar_prefetch = 0 : i64, scratch_operands = 0 : i64, tpu.core_type = #tpu.core_type<tc>, window_params = [{transform_indices = @transform_0, window_bounds = array<i64: 16, 128>}, {transform_indices = @transform_1, window_bounds = array<i64: 16, 128>}, {transform_indices = @transform_2, window_bounds = array<i64: 16, 128>}, {transform_indices = @transform_3, window_bounds = array<i64: 16, 128>}]} {
    %c0_i32 = arith.constant 0 : i32
    %0 = arith.cmpi eq, %arg1, %c0_i32 : i32
    %1 = arith.extui %0 : i1 to i32
    %c0_i32_0 = arith.constant 0 : i32
    %2 = arith.cmpi ne, %1, %c0_i32_0 : i32
    scf.if %2 {
      %cst_7 = arith.constant 0.000000e+00 : f32
      %16 = vector.broadcast %cst_7 : f32 to vector<16x128xf32>
      %c0_8 = arith.constant 0 : index
      %c0_9 = arith.constant 0 : index
      %17 = vector.load %arg4[%c0_8, %c0_9] : memref<16x128xf32, #tpu.memory_space<vmem>>, vector<16x128xf32>
      tpu.vector_store %arg4[%c0_8, %c0_9], %16 {strides = array<i32>} : memref<16x128xf32, #tpu.memory_space<vmem>>, vector<16x128xf32>,
      %cst_10 = arith.constant 0.000000e+00 : f32
      %18 = vector.broadcast %cst_10 : f32 to vector<16x128xf32>
      %c0_11 = arith.constant 0 : index
      %c0_12 = arith.constant 0 : index
      %19 = vector.load %arg5[%c0_11, %c0_12] : memref<16x128xf32, #tpu.memory_space<vmem>>, vector<16x128xf32>
      tpu.vector_store %arg5[%c0_11, %c0_12], %18 {strides = array<i32>} : memref<16x128xf32, #tpu.memory_space<vmem>>, vector<16x128xf32>,
    } else {
    }
    %c1_i32 = arith.constant 1 : i32
    %3 = arith.muli %arg0, %c1_i32 : i32
    %4 = arith.addi %3, %arg1 : i32
    %c0 = arith.constant 0 : index
    %c0_1 = arith.constant 0 : index
    %5 = vector.load %arg2[%c0, %c0_1] : memref<16x128xf32, #tpu.memory_space<vmem>>, vector<16x128xf32>
    %c0_2 = arith.constant 0 : index
    %c0_3 = arith.constant 0 : index
    %6 = vector.load %arg3[%c0_2, %c0_3] : memref<16x128xf32, #tpu.memory_space<vmem>>, vector<16x128xf32>
    %cst = arith.constant 0.000000e+00 : f32
    %7 = vector.broadcast %cst : f32 to vector<16x128xf32>
    %8 = arith.subf %7, %5 : vector<16x128xf32>
    %9 = math.exp %8 : vector<16x128xf32>
    %cst_4 = arith.constant 1.000000e+00 : f32
    %10 = vector.broadcast %cst_4 : f32 to vector<16x128xf32>
    %11 = arith.addf %10, %9 : vector<16x128xf32>
    %12 = tpu.reciprocal %11 {approx = true} : vector<16x128xf32> -> vector<16x128xf32>
    %c1_i32_5 = arith.constant 1 : i32
    %13 = arith.cmpi slt, %4, %c1_i32_5 : i32
    %14 = arith.extui %13 : i1 to i32
    %c0_i32_6 = arith.constant 0 : i32
    %15 = arith.cmpi ne, %14, %c0_i32_6 : i32
    scf.if %15 {
      %c0_7 = arith.constant 0 : index
      %c0_8 = arith.constant 0 : index
      %16 = vector.load %arg4[%c0_7, %c0_8] : memref<16x128xf32, #tpu.memory_space<vmem>>, vector<16x128xf32>
      %17 = arith.mulf %12, %6 : vector<16x128xf32>
      %18 = vector.shape_cast %17 : vector<16x128xf32> to vector<1x16x128xf32>
      %cst_9 = arith.constant dense<0.000000e+00> : vector<16x128xf32>
      %19 = vector.multi_reduction <add>, %18, %cst_9 [0] : vector<1x16x128xf32> to vector<16x128xf32>
      %20 = arith.addf %16, %19 : vector<16x128xf32>
      %c0_10 = arith.constant 0 : index
      %c0_11 = arith.constant 0 : index
      %21 = vector.load %arg4[%c0_10, %c0_11] : memref<16x128xf32, #tpu.memory_space<vmem>>, vector<16x128xf32>
      tpu.vector_store %arg4[%c0_10, %c0_11], %20 {strides = array<i32>} : memref<16x128xf32, #tpu.memory_space<vmem>>, vector<16x128xf32>,
      %c0_12 = arith.constant 0 : index
      %c0_13 = arith.constant 0 : index
      %22 = vector.load %arg5[%c0_12, %c0_13] : memref<16x128xf32, #tpu.memory_space<vmem>>, vector<16x128xf32>
      %23 = arith.addf %12, %6 : vector<16x128xf32>
      %24 = vector.shape_cast %23 : vector<16x128xf32> to vector<1x16x128xf32>
      %cst_14 = arith.constant dense<0.000000e+00> : vector<16x128xf32>
      %25 = vector.multi_reduction <add>, %24, %cst_14 [0] : vector<1x16x128xf32> to vector<16x128xf32>
      %26 = arith.addf %22, %25 : vector<16x128xf32>
      %c0_15 = arith.constant 0 : index
      %c0_16 = arith.constant 0 : index
      %27 = vector.load %arg5[%c0_15, %c0_16] : memref<16x128xf32, #tpu.memory_space<vmem>>, vector<16x128xf32>
      tpu.vector_store %arg5[%c0_15, %c0_16], %26 {strides = array<i32>} : memref<16x128xf32, #tpu.memory_space<vmem>>, vector<16x128xf32>,
    } else {
    }
    return
  }
  func.func @transform_0(%arg0: i32, %arg1: i32) -> (i32, i32) {
    %c1_i32 = arith.constant 1 : i32
    %0 = arith.muli %arg0, %c1_i32 : i32
    %1 = arith.addi %0, %arg1 : i32
    %c0_i32 = arith.constant 0 : i32
    %2 = arith.minsi %1, %c0_i32 : i32
    %c0_i32_0 = arith.constant 0 : i32
    %c0_i32_1 = arith.constant 0 : i32
    return %2, %c0_i32_0 : i32, i32
  }
  func.func @transform_1(%arg0: i32, %arg1: i32) -> (i32, i32) {
    %c1_i32 = arith.constant 1 : i32
    %0 = arith.muli %arg0, %c1_i32 : i32
    %1 = arith.addi %0, %arg1 : i32
    %c0_i32 = arith.constant 0 : i32
    %2 = arith.minsi %1, %c0_i32 : i32
    %c0_i32_0 = arith.constant 0 : i32
    %c0_i32_1 = arith.constant 0 : i32
    return %2, %c0_i32_0 : i32, i32
  }
  func.func @transform_2(%arg0: i32, %arg1: i32) -> (i32, i32) {
    %c0_i32 = arith.constant 0 : i32
    %c0_i32_0 = arith.constant 0 : i32
    return %arg0, %c0_i32 : i32, i32
  }
  func.func @transform_3(%arg0: i32, %arg1: i32) -> (i32, i32) {
    %c0_i32 = arith.constant 0 : i32
    %c0_i32_0 = arith.constant 0 : i32
    return %arg0, %c0_i32 : i32, i32
  }
}

</mosaic_0001>

<llo_original>
// kernel: tpu_custom_call.1
$region0: #{tpu_custom_call.1}
  #allocation0 [shape = 'u32[]', space=smem, size = 0x4, offset = 0x4, fixed_abs, tag = 'smem constant byte address 0x4 - core index']
  #allocation1 [shape = 'u32[144,128]{1,0:T(1,128)}', space=vmem, size = 0x12000, scoped, tag = 'internal scratch']
  %s0 = inlined_call_operand.hbm [shape: f32[16,128], index: 0, kind: input, shape index: {}]
  %s1 = inlined_call_operand.hbm [shape: f32[16,128], index: 1, kind: input, shape index: {}]
  %s2 = inlined_call_operand.hbm [shape: f32[16,128], index: 2, kind: output, shape index: {0}]
  %s3 = inlined_call_operand.hbm [shape: f32[16,128], index: 3, kind: output, shape index: {1}]
  %4 = xla_tuple %s2, %s3
  %s5 = sld [smem:[#allocation0]]
  $region42: #{tpu_custom_call.1} parent=0
    _
  %s7 = ssub.s32 1, %s5
  %s8 = scalar_select 0, %s7, %s5
  $region1: #{tpu_custom_call.1} parent=0
    #allocation2 [shape = 'u8[8192]{0}', space=vmem, size = 0x2000, scoped, tag = 'input window, operand 0, single buffered']
    #allocation3 [shape = 's32[1]{0}', space=sflag, size = 0x4, scoped, tag = 'scoped memory for tpu_custom_call.1']
    #allocation4 [shape = 's32[1]{0}', space=sflag, size = 0x4, scoped, tag = 'scoped memory for tpu_custom_call.1']
    #allocation5 [shape = 'u8[8192]{0}', space=vmem, size = 0x2000, scoped, tag = 'input window, operand 1, single buffered']
    #allocation6 [shape = 's32[1]{0}', space=sflag, size = 0x4, scoped, tag = 'scoped memory for tpu_custom_call.1']
    #allocation7 [shape = 'u8[8192]{0}', space=vmem, size = 0x2000, scoped, tag = 'output window, operand 0, single buffered']
    #allocation8 [shape = 'u8[8192]{0}', space=vmem, size = 0x2000, scoped, tag = 'output window, operand 1, single buffered']
    #allocation9 [shape = 's32[1]{0}', space=sflag, size = 0x4, scoped, tag = 'scoped memory for tpu_custom_call.1']
    %9 = vsyncpa [#allocation3], 0
    %10 = vsyncpa [#allocation6], 0
    %11 = vsyncpa [#allocation4], 0
    %12 = vsyncpa [#allocation9], 0
    // Predicated region
    $region2: #{tpu_custom_call.1} parent=1 // pred_check
      _
    $region3: #{tpu_custom_call.1} parent=1 // pred_check_branch
      %14 = sbr.rel (0) target = $region5
    $region4: #{tpu_custom_call.1} parent=1 // pred_region
      %s15 = sadd.s32 0, 0
      %p16 = scmp.lt.s32.totalorder %s15, 0
      %s17 = scalar_select %p16, %s15, 0
      %s18 = smul.u32 2, %s17
      %s20 = ssub.s32 256, 256
      %21 = vsyncadd [#allocation3], %s20
      %s22 = smul.addr %s18, 128
      %s23 = scalar_lea.hbm %s0, %s22
      %s24 = sshll.u32 [#allocation2], 4
      %s25 = int_to_ptr.vmem [resolvable:$true] %s24
      %30 = dma.hbm_to_vmem [thread:$0]  %s23, 256, %s25, [#allocation3], 128, 128, 8
    $region5: #{tpu_custom_call.1} parent=1 // pred_fallthru
      _
    // Predicated region
    $region6: #{tpu_custom_call.1} parent=1 // pred_check
      _
    $region7: #{tpu_custom_call.1} parent=1 // pred_check_branch
      %32 = sbr.rel (0) target = $region9
    $region8: #{tpu_custom_call.1} parent=1 // pred_region
      %s33 = sadd.s32 0, 0
      %p34 = scmp.lt.s32.totalorder %s33, 0
      %s35 = scalar_select %p34, %s33, 0
      %s36 = smul.u32 2, %s35
      %s38 = ssub.s32 256, 256
      %39 = vsyncadd [#allocation6], %s38
      %s40 = smul.addr %s36, 128
      %s41 = scalar_lea.hbm %s1, %s40
      %s42 = sshll.u32 [#allocation5], 4
      %s43 = int_to_ptr.vmem [resolvable:$true] %s42
      %48 = dma.hbm_to_vmem [thread:$0]  %s41, 256, %s43, [#allocation6], 128, 128, 8
    $region9: #{tpu_custom_call.1} parent=1 // pred_fallthru
      _
    // Predicated region
    $region10: #{tpu_custom_call.1} parent=1 // pred_check
      _
    $region11: #{tpu_custom_call.1} parent=1 // pred_check_branch
      %50 = sbr.rel (0) target = $region13
    $region12: #{tpu_custom_call.1} parent=1 // pred_region
      %51 = dma.done [#allocation3], 256
    $region13: #{tpu_custom_call.1} parent=1 // pred_fallthru
      _
    // Predicated region
    $region14: #{tpu_custom_call.1} parent=1 // pred_check
      _
    $region15: #{tpu_custom_call.1} parent=1 // pred_check_branch
      %53 = sbr.rel (0) target = $region17
    $region16: #{tpu_custom_call.1} parent=1 // pred_region
      %54 = dma.done [#allocation6], 256
    $region17: #{tpu_custom_call.1} parent=1 // pred_fallthru
      _
    %s55 = sadd.s32 0, 0
    %p56 = scmp.lt.s32.totalorder %s55, 0
    %s57 = scalar_select %p56, %s55, 0
    %s58 = smul.u32 2, %s57
    %s59 = sadd.s32 0, 0
    %p60 = scmp.lt.s32.totalorder %s59, 0
    %s61 = scalar_select %p60, %s59, 0
    %s62 = smul.u32 2, %s61
    %p63 = scmp.eq.s32.totalorder 0, 0
    // Predicated region
    $region18: #{tpu_custom_call.1} parent=1 // pred_check
      %p64 = pneg %p63
    $region19: #{tpu_custom_call.1} parent=1 // pred_check_branch
      %66 = sbr.rel (%p64) target = $region21
    $region20: #{tpu_custom_call.1} parent=1 // pred_region
      %67 = vst [vmem:[#allocation7] sm:$0xff] 0.0
      %68 = vst [vmem:[#allocation7 + $0x8] sm:$0xff] 0.0
      %69 = vst [vmem:[#allocation8] sm:$0xff] 0.0
      %70 = vst [vmem:[#allocation8 + $0x8] sm:$0xff] 0.0
    $region21: #{tpu_custom_call.1} parent=1 // pred_fallthru
      _
    %s71 = sadd.s32 0, 0
    %v72 = vld [vmem:[#allocation2] sm:$0xff]
    %v73 = vld [vmem:[#allocation2 + $0x8] sm:$0xff]
    %v74 = vld [vmem:[#allocation5] sm:$0xff]
    %v75 = vld [vmem:[#allocation5 + $0x8] sm:$0xff]
    %v76 = vsub.f32 0.0, %v72
    %v77 = vsub.f32 0.0, %v73
    %v78 = vmul.f32 %v76, 1.442695
    %v79 = vpow.pop %v78
    %v80 = vmul.f32 %v77, 1.442695
    %v81 = vpow.pop %v80
    %v82 = vadd.f32 %v79, 1.0
    %v83 = vadd.f32 %v81, 1.0
    %v84 = vrcp.pop %v82
    %v85 = vrcp.pop %v83
    %p86 = scmp.lt.s32.totalorder %s71, 1
    // Predicated region
    $region22: #{tpu_custom_call.1} parent=1 // pred_check
      %p87 = pneg %p86
    $region23: #{tpu_custom_call.1} parent=1 // pred_check_branch
      %89 = sbr.rel (%p87) target = $region25
    $region24: #{tpu_custom_call.1} parent=1 // pred_region
      %v90 = vld [vmem:[#allocation7] sm:$0xff]
      %v91 = vld [vmem:[#allocation7 + $0x8] sm:$0xff]
      %v92 = vmul.f32 %v84, %v74
      %v93 = vmul.f32 %v85, %v75
      %v94 = vadd.f32 %v92, 0.0
      %v95 = vadd.f32 %v93, 0.0
      %v96 = vadd.f32 %v90, %v94
      %v97 = vadd.f32 %v91, %v95
      %98 = vst [vmem:[#allocation7] sm:$0xff] %v96
      %99 = vst [vmem:[#allocation7 + $0x8] sm:$0xff] %v97
      %v100 = vld [vmem:[#allocation8] sm:$0xff]
      %v101 = vld [vmem:[#allocation8 + $0x8] sm:$0xff]
      %v102 = vadd.f32 %v84, %v74
      %v103 = vadd.f32 %v85, %v75
      %v104 = vadd.f32 %v102, 0.0
      %v105 = vadd.f32 %v103, 0.0
      %v106 = vadd.f32 %v100, %v104
      %v107 = vadd.f32 %v101, %v105
      %108 = vst [vmem:[#allocation8] sm:$0xff] %v106
      %109 = vst [vmem:[#allocation8 + $0x8] sm:$0xff] %v107
    $region25: #{tpu_custom_call.1} parent=1 // pred_fallthru
      _
    // Predicated region
    $region26: #{tpu_custom_call.1} parent=1 // pred_check
      _
    $region27: #{tpu_custom_call.1} parent=1 // pred_check_branch
      %111 = sbr.rel (0) target = $region29
    $region28: #{tpu_custom_call.1} parent=1 // pred_region
      %s113 = ssub.s32 256, 256
      %114 = vsyncadd [#allocation4], %s113
      %s115 = sshll.u32 [#allocation7], 4
      %s116 = int_to_ptr.vmem [resolvable:$true] %s115
      %121 = dma.vmem_to_hbm [thread:$0]  %s116, 256, %s2, [#allocation4], 128, 128, 8
    $region29: #{tpu_custom_call.1} parent=1 // pred_fallthru
      _
    // Predicated region
    $region30: #{tpu_custom_call.1} parent=1 // pred_check
      _
    $region31: #{tpu_custom_call.1} parent=1 // pred_check_branch
      %123 = sbr.rel (0) target = $region33
    $region32: #{tpu_custom_call.1} parent=1 // pred_region
      %s125 = ssub.s32 256, 256
      %126 = vsyncadd [#allocation9], %s125
      %s127 = sshll.u32 [#allocation8], 4
      %s128 = int_to_ptr.vmem [resolvable:$true] %s127
      %133 = dma.vmem_to_hbm [thread:$0]  %s128, 256, %s3, [#allocation9], 128, 128, 8
    $region33: #{tpu_custom_call.1} parent=1 // pred_fallthru
      _
    // Predicated region
    $region34: #{tpu_custom_call.1} parent=1 // pred_check
      _
    $region35: #{tpu_custom_call.1} parent=1 // pred_check_branch
      %135 = sbr.rel (0) target = $region37
    $region36: #{tpu_custom_call.1} parent=1 // pred_region
      %136 = dma.done [#allocation4], 256
    $region37: #{tpu_custom_call.1} parent=1 // pred_fallthru
      _
    // Predicated region
    $region38: #{tpu_custom_call.1} parent=1 // pred_check
      _
    $region39: #{tpu_custom_call.1} parent=1 // pred_check_branch
      %138 = sbr.rel (0) target = $region41
    $region40: #{tpu_custom_call.1} parent=1 // pred_region
      %139 = dma.done [#allocation9], 256
    $region41: #{tpu_custom_call.1} parent=1 // pred_fallthru
      _
    %140 = vsyncpa [#allocation3], 1
    %141 = vsyncpa [#allocation6], 1
    %142 = vsyncpa [#allocation4], 1
    %143 = vsyncpa [#allocation9], 1

</llo_original>
